<compile_context>
chip_gen: v5e
topology: v5e:2x2
jax: 0.10.0
libtpu: 0.0.40
codegen_flags: <defaults>
</compile_context>

<pallas_src>
import jax
import jax.numpy as jnp
from jax.experimental import pallas as pl
from jax.experimental.pallas import tpu as pltpu

_MIB = 1024 * 1024


def _vmem_budget():
    """(physical VMEM bytes, usable scoped-VMEM budget) for the current chip."""
    try:
        cap = int(pltpu.get_tpu_info().vmem_capacity_bytes)
    except Exception:  # interpret mode / older runtime: be conservative (v7x-sized)
        cap = 64 * _MIB
    headroom = 8 * _MIB if cap <= 64 * _MIB else 16 * _MIB
    return cap, max(cap - headroom, 16 * _MIB)


# --------------------------------------------------------------------------- fused path
def _cca_fused_kernel(x_ref, wT_ref, b_ref, o_ref):
    # x_ref: (Bt, C, HW)   wT_ref: (C, C) == (w / HW).T   b_ref: (1, C)   o_ref: (Bt, C, HW)
    # Phase 1: global average pool as a pure sum (1/HW folded into wT); f32 accumulation.
    gap = jnp.sum(x_ref[...].astype(jnp.float32), axis=-1)                    # (Bt, C)
    # 1x1 conv on the pooled vector (+ bias), then sigmoid (EUP).
    z = jnp.dot(gap, wT_ref[...], preferred_element_type=jnp.float32) + b_ref[...]
    attn = jax.nn.sigmoid(z)                                                   # (Bt, C)
    # Phase 2: re-read the slab (cheap VMEM re-read) and do the broadcast multiply.
    x = x_ref[...]
    o_ref[...] = (x * attn.astype(x.dtype)[:, :, None]).astype(o_ref.dtype)


def _cca_fused(x2, wT, b_row, B, C, HW, cap, budget):
    itemsize = x2.dtype.itemsize
    plane_bytes = C * HW * itemsize
    weight_bytes = 2 * (C * C + C) * 4                          # wT + bias (double-buffered)
    slab_budget = max((budget - weight_bytes - _MIB) // 4, plane_bytes)

    Bt = max(1, min(B, slab_budget // max(1, plane_bytes)))
    # >=4 steps on 2-TensorCore (64 MiB VMEM) chips, >=3 otherwise, when B permits.
    min_steps = 4 if cap <= 96 * _MIB else 3
    desired_steps = min(B, min_steps)
    if desired_steps > 1:
        Bt = min(Bt, pl.cdiv(B, desired_steps))
    Bt = max(1, Bt)
    grid = (pl.cdiv(B, Bt),)                                    # ragged last block allowed

    vmem_needed = 4 * Bt * plane_bytes + weight_bytes + _MIB
    vmem_limit = int(min(max(vmem_needed, 16 * _MIB), budget))

    cost = pl.CostEstimate(
        flops=2 * B * C * C + 2 * B * C * HW,
        transcendentals=B * C,
        bytes_accessed=2 * B * C * HW * itemsize + (C * C + C) * 4,
    )

    return pl.pallas_call(
        _cca_fused_kernel,
        out_shape=jax.ShapeDtypeStruct((B, C, HW), x2.dtype),
        grid_spec=pltpu.PrefetchScalarGridSpec(
            num_scalar_prefetch=0,
            grid=grid,
            in_specs=[
                pl.BlockSpec((Bt, C, HW), lambda i: (i, 0, 0)),   # batch-blocked slab
                pl.BlockSpec((C, C), lambda i: (0, 0)),           # shared weights (same block -> no re-fetch)
                pl.BlockSpec((1, C), lambda i: (0, 0)),           # shared bias
            ],
            out_specs=pl.BlockSpec((Bt, C, HW), lambda i: (i, 0, 0)),
        ),
        compiler_params=pltpu.CompilerParams(
            dimension_semantics=("parallel",),
            vmem_limit_bytes=vmem_limit,
        ),
        cost_estimate=cost,
    )(x2, wT, b_row)


# ------------------------------------------------------------------------ fallback path
def _cca_scale_kernel(x_ref, attn_ref, o_ref):
    # x_ref: (1, C, T)   attn_ref: (1, C, 1)   o_ref: (1, C, T)
    o_ref[...] = x_ref[...] * attn_ref[...]


def _cca_fallback(x2, wT, b_row, B, C, HW, budget):
    # attn via plain XLA (one streaming read of x); Pallas does the HW-tiled multiply.
    gap = jnp.sum(x2.astype(jnp.float32), axis=-1)              # (B, C); 1/HW already in wT
    attn = jax.nn.sigmoid(gap @ wT + b_row)                     # (B, C)
    attn3 = attn.astype(x2.dtype).reshape(B, C, 1)

    itemsize = x2.dtype.itemsize
    slab_budget = max((budget - _MIB) // 4, C * 128 * itemsize)
    cap_t = slab_budget // max(1, C * itemsize)
    if cap_t >= HW:
        T = HW                                                  # full extent: always legal
    else:
        T = max(128, (cap_t // 128) * 128)                      # lane-aligned HW tile
    grid = (B, pl.cdiv(HW, T))

    vmem_needed = 4 * C * T * itemsize + 2 * C * itemsize + _MIB
    vmem_limit = int(min(max(vmem_needed, 16 * _MIB), budget))

    cost = pl.CostEstimate(
        flops=B * C * HW,
        transcendentals=0,
        bytes_accessed=2 * B * C * HW * itemsize + B * C * itemsize,
    )

    return pl.pallas_call(
        _cca_scale_kernel,
        out_shape=jax.ShapeDtypeStruct((B, C, HW), x2.dtype),
        grid_spec=pltpu.PrefetchScalarGridSpec(
            num_scalar_prefetch=0,
            grid=grid,
            in_specs=[
                pl.BlockSpec((1, C, T), lambda b, t: (b, 0, t)),
                pl.BlockSpec((1, C, 1), lambda b, t: (b, 0, 0)),
            ],
            out_specs=pl.BlockSpec((1, C, T), lambda b, t: (b, 0, t)),
        ),
        compiler_params=pltpu.CompilerParams(
            dimension_semantics=("parallel", "parallel"),
            vmem_limit_bytes=vmem_limit,
        ),
        cost_estimate=cost,
    )(x2, attn3)


# --------------------------------------------------------------------------------- API
def compact_channel_attn(x, w, b, *, _force_fallback=False):
    """x: (B, C, H, W); w: (C, C) (1x1 conv weight squeezed); b: (C,)."""
    B, C, H, W = x.shape
    HW = H * W

    x2 = x.reshape(B, C, HW)                                    # free view, no HBM pass
    wT = (w.astype(jnp.float32) / float(HW)).T                  # fold 1/HW of the mean
    b_row = b.astype(jnp.float32).reshape(1, C)

    cap, budget = _vmem_budget()
    itemsize = x2.dtype.itemsize
    plane_bytes = C * HW * itemsize
    weight_bytes = 2 * (C * C + C) * 4
    fits_fused = 4 * plane_bytes + weight_bytes + _MIB <= budget

    if fits_fused and not _force_fallback:
        out = _cca_fused(x2, wT, b_row, B, C, HW, cap, budget)
    else:
        out = _cca_fallback(x2, wT, b_row, B, C, HW, budget)
    return out.reshape(B, C, H, W)


def reference(x, w, b):
    gap = jnp.mean(x.astype(jnp.float32), axis=(2, 3), keepdims=True)            # (B, C, 1, 1)
    z = jnp.einsum("ck,bkij->bcij", w.astype(jnp.float32), gap)
    z = z + b.astype(jnp.float32).reshape(1, -1, 1, 1)
    return x * jax.nn.sigmoid(z).astype(x.dtype)


def _check(x, w, b, atol=1e-5, rtol=1e-5):
    ref = reference(x, w, b)
    out = jax.block_until_ready(compact_channel_attn(x, w, b))
    assert out.shape == x.shape
    assert jnp.allclose(out, ref, atol=atol, rtol=rtol), "fused path mismatch vs reference"
    out_fb = jax.block_until_ready(compact_channel_attn(x, w, b, _force_fallback=True))
    assert jnp.allclose(out_fb, ref, atol=atol, rtol=rtol), "fallback path mismatch vs reference"


if __name__ == "__main__":
    key = jax.random.PRNGKey(0)

    # Primary small test (shapes implied by the module): B=2, C=4, 16x16 spatial.
    B, C, H, W = 2, 4, 16, 16
    kx, kw, kb = jax.random.split(key, 3)
    x = jax.random.normal(kx, (B, C, H, W), dtype=jnp.float32)
    # deterministic synthetic Conv2d(C, C, kernel_size=1) parameters (weight squeezed to (C, C))
    w = jax.random.normal(kw, (C, C), dtype=jnp.float32) * 0.1
    b = jax.random.normal(kb, (C,), dtype=jnp.float32) * 0.1
    _check(x, w, b)

    # Unaligned / ragged-block test: C not a multiple of 8, HW not a multiple of 128,
    # batch not a multiple of the block size -> exercises the no-padding masked path.
    B2, C2, H2, W2 = 5, 5, 7, 9
    kx2, kw2, kb2 = jax.random.split(jax.random.PRNGKey(1), 3)
    x2 = jax.random.normal(kx2, (B2, C2, H2, W2), dtype=jnp.float32)
    w2 = jax.random.normal(kw2, (C2, C2), dtype=jnp.float32) * 0.1
    b2 = jax.random.normal(kb2, (C2,), dtype=jnp.float32) * 0.1
    _check(x2, w2, b2)

    print("KERNEL_OK")
</pallas_src>

<mosaic_0001>
module attributes {stable_mosaic.version = 11 : i64} {
  func.func @_cca_fused_kernel(%arg0: i32, %arg1: memref<1x4x256xf32, #tpu.memory_space<vmem>>, %arg2: memref<4x4xf32, #tpu.memory_space<vmem>>, %arg3: memref<1x4xf32, #tpu.memory_space<vmem>>, %arg4: memref<1x4x256xf32, #tpu.memory_space<vmem>>) attributes {dimension_semantics = [#tpu.dimension_semantics<parallel>], iteration_bounds = array<i64: 2>, scalar_prefetch = 0 : i64, scratch_operands = 0 : i64, tpu.core_type = #tpu.core_type<tc>, window_params = [{transform_indices = @transform_0, window_bounds = array<i64: 1, 4, 256>}, {pipeline_mode = #tpu.pipeline_mode<synchronous>, transform_indices = @transform_1, window_bounds = array<i64: 4, 4>}, {pipeline_mode = #tpu.pipeline_mode<synchronous>, transform_indices = @transform_2, window_bounds = array<i64: 1, 4>}, {transform_indices = @transform_3, window_bounds = array<i64: 1, 4, 256>}]} {
    %c0 = arith.constant 0 : index
    %c0_0 = arith.constant 0 : index
    %c0_1 = arith.constant 0 : index
    %0 = vector.load %arg1[%c0, %c0_0, %c0_1] : memref<1x4x256xf32, #tpu.memory_space<vmem>>, vector<1x4x256xf32>
    %cst = arith.constant dense<0.000000e+00> : vector<1x4xf32>
    %1 = vector.multi_reduction <add>, %0, %cst [2] : vector<1x4x256xf32> to vector<1x4xf32>
    %c0_2 = arith.constant 0 : index
    %c0_3 = arith.constant 0 : index
    %2 = vector.load %arg2[%c0_2, %c0_3] : memref<4x4xf32, #tpu.memory_space<vmem>>, vector<4x4xf32>
    %cst_4 = arith.constant dense<0.000000e+00> : vector<1x4xf32>
    %3 = tpu.matmul %1, %2, %cst_4 {dimension_numbers = #tpu.dot_dimension_numbers<[1], [0], [0], [1], [0, 0, 1, 1], [], []>} : vector<1x4xf32>, vector<4x4xf32>, vector<1x4xf32> -> vector<1x4xf32>
    %c0_5 = arith.constant 0 : index
    %c0_6 = arith.constant 0 : index
    %4 = vector.load %arg3[%c0_5, %c0_6] : memref<1x4xf32, #tpu.memory_space<vmem>>, vector<1x4xf32>
    %5 = arith.addf %3, %4 : vector<1x4xf32>
    %6 = arith.negf %5 : vector<1x4xf32>
    %7 = math.exp %6 : vector<1x4xf32>
    %cst_7 = arith.constant 1.000000e+00 : f32
    %8 = vector.broadcast %cst_7 : f32 to vector<1x4xf32>
    %9 = arith.addf %8, %7 : vector<1x4xf32>
    %10 = arith.divf %8, %9 : vector<1x4xf32>
    %c0_8 = arith.constant 0 : index
    %c0_9 = arith.constant 0 : index
    %c0_10 = arith.constant 0 : index
    %11 = vector.load %arg1[%c0_8, %c0_9, %c0_10] : memref<1x4x256xf32, #tpu.memory_space<vmem>>, vector<1x4x256xf32>
    %12 = vector.shape_cast %10 : vector<1x4xf32> to vector<1x4x1xf32>
    %13 = vector.broadcast %12 : vector<1x4x1xf32> to vector<1x4x256xf32>
    %14 = arith.mulf %11, %13 : vector<1x4x256xf32>
    %c0_11 = arith.constant 0 : index
    %c0_12 = arith.constant 0 : index
    %c0_13 = arith.constant 0 : index
    %15 = vector.load %arg4[%c0_11, %c0_12, %c0_13] : memref<1x4x256xf32, #tpu.memory_space<vmem>>, vector<1x4x256xf32>
    tpu.vector_store %arg4[%c0_11, %c0_12, %c0_13], %14 {strides = array<i32>} : memref<1x4x256xf32, #tpu.memory_space<vmem>>, vector<1x4x256xf32>,
    return
  }
  func.func @transform_0(%arg0: i32) -> (i32, i32, i32) {
    %c0_i32 = arith.constant 0 : i32
    %c0_i32_0 = arith.constant 0 : i32
    %c0_i32_1 = arith.constant 0 : i32
    return %arg0, %c0_i32, %c0_i32_0 : i32, i32, i32
  }
  func.func @transform_1(%arg0: i32) -> (i32, i32) {
    %c0_i32 = arith.constant 0 : i32
    %c0_i32_0 = arith.constant 0 : i32
    %c0_i32_1 = arith.constant 0 : i32
    return %c0_i32, %c0_i32_0 : i32, i32
  }
  func.func @transform_2(%arg0: i32) -> (i32, i32) {
    %c0_i32 = arith.constant 0 : i32
    %c0_i32_0 = arith.constant 0 : i32
    %c0_i32_1 = arith.constant 0 : i32
    return %c0_i32, %c0_i32_0 : i32, i32
  }
  func.func @transform_3(%arg0: i32) -> (i32, i32, i32) {
    %c0_i32 = arith.constant 0 : i32
    %c0_i32_0 = arith.constant 0 : i32
    %c0_i32_1 = arith.constant 0 : i32
    return %arg0, %c0_i32, %c0_i32_0 : i32, i32, i32
  }
}

</mosaic_0001>

<llo_original>
// kernel: tpu_custom_call.1
$region0: #{tpu_custom_call.1}
  #allocation0 [shape = 'u32[]', space=smem, size = 0x4, offset = 0x4, fixed_abs, tag = 'smem constant byte address 0x4 - core index']
  #allocation1 [shape = 'u32[72,128]{1,0:T(1,128)}', space=vmem, size = 0x9000, scoped, tag = 'internal scratch']
  %s0 = inlined_call_operand.hbm [shape: f32[2,4,256], index: 0, kind: input, shape index: {}]
  %s1 = inlined_call_operand.hbm [shape: f32[4,4], index: 1, kind: input, shape index: {}]
  %s2 = inlined_call_operand.vmem [shape: f32[1,4], index: 2, kind: input, shape index: {}]
  %s3 = inlined_call_operand.hbm [shape: f32[2,4,256], index: 3, kind: output, shape index: {}]
  %s4 = sld [smem:[#allocation0]]
  $region53: #{tpu_custom_call.1} parent=0
    _
  %s6 = ssub.s32 1, %s4
  %s7 = scalar_select 0, %s6, %s4
  $region1: #{tpu_custom_call.1} parent=0
    #allocation2 [shape = 'u8[8192]{0}', space=vmem, size = 0x2000, scoped, tag = 'input window, operand 0']
    #allocation3 [shape = 's32[2]{0}', space=sflag, size = 0x8, scoped, tag = 'scoped memory for tpu_custom_call.1']
    #allocation4 [shape = 's32[2]{0}', space=sflag, size = 0x8, scoped, tag = 'scoped memory for tpu_custom_call.1']
    #allocation5 [shape = 'u8[2048]{0}', space=vmem, size = 0x800, scoped, tag = 'input window, operand 1, single buffered']
    #allocation6 [shape = 's32[1]{0}', space=sflag, size = 0x4, scoped, tag = 'scoped memory for tpu_custom_call.1']
    #allocation7 [shape = 'u8[8192]{0}', space=vmem, size = 0x2000, scoped, tag = 'output window, operand 0']
    %8 = vsyncpa [#allocation3], 0
    %s9 = scalar_lea.sflag [#allocation3], 1
    %10 = vsyncpa %s9, 0
    %11 = vsyncpa [#allocation6], 0
    %12 = vsyncpa [#allocation4], 0
    %s13 = scalar_lea.sflag [#allocation4], 1
    %14 = vsyncpa %s13, 0
    loop: start=0, step=1, limit=4
    $region2: #{tpu_custom_call.1} parent=1 // loop_pre_header
      _
    $region3: #{tpu_custom_call.1} parent=1 // loop_header
      %s16 = sphi 0, %s20
      %p17 = scmp.ge.s32.totalorder %s16, 4
      %s26 = sphi 0, %s28
      %s29 = sphi 0, %s26
      %s30 = sphi 0, %s29
      %s46 = sphi 0, %s30
      %s50 = sphi 0, %s50
      %s52 = sphi 0, %s50
      %s53 = sphi 0, %s52
      %s67 = sphi 0, %s53
      %s71 = sphi 0, %s71
      %s73 = sphi 0, %s71
      %s74 = sphi 0, %s73
      %s88 = sphi 0, %s74
      %s94 = sphi 0, %s96
      %s97 = sphi 0, %s94
      %s98 = sphi 0, %s97
      %s114 = sphi 0, %s98
    $region4: #{tpu_custom_call.1} parent=1 // loop_header_branch
      %19 = sbr.rel (%p17) target = $region8
    $region5: #{tpu_custom_call.1} parent=1 // loop_body
      %s21 = ssub.s32 %s16, 1
      %s22 = ssub.s32 %s16, 2
      %s23 = sadd.s32 %s16, 1
      %s24 = ssub.s32 %s16, %s23
      %p25 = scmp.eq.s32.totalorder %s24, 0
      %s27 = sadd.s32 %s26, 1
      %s28 = scalar_select %p25, %s26, %s27
      %p31 = pneg %p25
      %p32 = scmp.eq.s32.totalorder %s16, 1
      %p33 = por %p31, %p32
      %p34 = scmp.ne.s32.totalorder %s26, %s29
      %p35 = scmp.eq.s32.totalorder %s16, 0
      %p36 = por %p34, %p35
      %p37 = scmp.ne.s32.totalorder %s26, %s29
      %p38 = scmp.eq.s32.totalorder %s21, 1
      %p39 = por %p37, %p38
      %p40 = scmp.ne.s32.totalorder %s29, %s30
      %p41 = scmp.eq.s32.totalorder %s21, 0
      %p42 = por %p40, %p41
      %p43 = scmp.ne.s32.totalorder %s29, %s30
      %p44 = scmp.eq.s32.totalorder %s22, 1
      %p45 = por %p43, %p44
      %p47 = scmp.ne.s32.totalorder %s30, %s46
      %p48 = scmp.eq.s32.totalorder %s22, 0
      %p49 = por %p47, %p48
      %s51 = sadd.s32 %s50, 1
      %p54 = scmp.eq.s32.totalorder %s16, 1
      %p55 = scmp.ne.s32.totalorder %s50, %s52
      %p56 = scmp.eq.s32.totalorder %s16, 0
      %p57 = por %p55, %p56
      %p58 = scmp.ne.s32.totalorder %s50, %s52
      %p59 = scmp.eq.s32.totalorder %s21, 1
      %p60 = por %p58, %p59
      %p61 = scmp.ne.s32.totalorder %s52, %s53
      %p62 = scmp.eq.s32.totalorder %s21, 0
      %p63 = por %p61, %p62
      %p64 = scmp.ne.s32.totalorder %s52, %s53
      %p65 = scmp.eq.s32.totalorder %s22, 1
      %p66 = por %p64, %p65
      %p68 = scmp.ne.s32.totalorder %s53, %s67
      %p69 = scmp.eq.s32.totalorder %s22, 0
      %p70 = por %p68, %p69
      %s72 = sadd.s32 %s71, 1
      %p75 = scmp.eq.s32.totalorder %s16, 1
      %p76 = scmp.ne.s32.totalorder %s71, %s73
      %p77 = scmp.eq.s32.totalorder %s16, 0
      %p78 = por %p76, %p77
      %p79 = scmp.ne.s32.totalorder %s71, %s73
      %p80 = scmp.eq.s32.totalorder %s21, 1
      %p81 = por %p79, %p80
      %p82 = scmp.ne.s32.totalorder %s73, %s74
      %p83 = scmp.eq.s32.totalorder %s21, 0
      %p84 = por %p82, %p83
      %p85 = scmp.ne.s32.totalorder %s73, %s74
      %p86 = scmp.eq.s32.totalorder %s22, 1
      %p87 = por %p85, %p86
      %p89 = scmp.ne.s32.totalorder %s74, %s88
      %p90 = scmp.eq.s32.totalorder %s22, 0
      %p91 = por %p89, %p90
      %s92 = ssub.s32 %s16, %s23
      %p93 = scmp.eq.s32.totalorder %s92, 0
      %s95 = sadd.s32 %s94, 1
      %s96 = scalar_select %p93, %s94, %s95
      %p99 = pneg %p93
      %p100 = scmp.eq.s32.totalorder %s16, 1
      %p101 = por %p99, %p100
      %p102 = scmp.ne.s32.totalorder %s94, %s97
      %p103 = scmp.eq.s32.totalorder %s16, 0
      %p104 = por %p102, %p103
      %p105 = scmp.ne.s32.totalorder %s94, %s97
      %p106 = scmp.eq.s32.totalorder %s21, 1
      %p107 = por %p105, %p106
      %p108 = scmp.ne.s32.totalorder %s97, %s98
      %p109 = scmp.eq.s32.totalorder %s21, 0
      %p110 = por %p108, %p109
      %p111 = scmp.ne.s32.totalorder %s97, %s98
      %p112 = scmp.eq.s32.totalorder %s22, 1
      %p113 = por %p111, %p112
      %p115 = scmp.ne.s32.totalorder %s98, %s114
      %p116 = scmp.eq.s32.totalorder %s22, 0
      %p117 = por %p115, %p116
      %p118 = scmp.le.s32.totalorder 1, %s16
      %p119 = scmp.lt.s32.totalorder %s16, 3
      %p120 = pnand %p118, %p119
      %p121 = pneg %p120
      // Predicated region
      $region9: #{tpu_custom_call.1} parent=5 // pred_check
        _
      $region10: #{tpu_custom_call.1} parent=5 // pred_check_branch
        %123 = sbr.rel (%p120) target = $region12
      $region11: #{tpu_custom_call.1} parent=5 // pred_region
        %s124 = ssub.s32 %s16, 1
        // Predicated region
        $region13: #{tpu_custom_call.1} parent=11 // pred_check
          %p125 = pneg %p63
        $region14: #{tpu_custom_call.1} parent=11 // pred_check_branch
          %127 = sbr.rel (%p125) target = $region16
        $region15: #{tpu_custom_call.1} parent=11 // pred_region
          %129 = vsyncadd [#allocation6], 0
          %s131 = sshll.u32 %s1, 4
          %s132 = int_to_ptr.hbm [resolvable:$true] %s131
          %s133 = sshll.u32 [#allocation5], 4
          %s134 = int_to_ptr.vmem [resolvable:$true] %s133
          %136 = dma.hbm_to_vmem [thread:$0]  %s132, 64, %s134, [#allocation6]
        $region16: #{tpu_custom_call.1} parent=11 // pred_fallthru
          _
        // Predicated region
        $region17: #{tpu_custom_call.1} parent=11 // pred_check
          %p137 = pneg %p84
        $region18: #{tpu_custom_call.1} parent=11 // pred_check_branch
          %139 = sbr.rel (%p137) target = $region20
        $region19: #{tpu_custom_call.1} parent=11 // pred_region
          _
        $region20: #{tpu_custom_call.1} parent=11 // pred_fallthru
          _
      $region12: #{tpu_custom_call.1} parent=5 // pred_fallthru
        _
      %p140 = scmp.lt.s32.totalorder %s16, 2
      // Predicated region
      $region21: #{tpu_custom_call.1} parent=5 // pred_check
        %p141 = pneg %p140
      $region22: #{tpu_custom_call.1} parent=5 // pred_check_branch
        %143 = sbr.rel (%p141) target = $region24
      $region23: #{tpu_custom_call.1} parent=5 // pred_region
        // Predicated region
        $region25: #{tpu_custom_call.1} parent=23 // pred_check
          %p144 = pneg %p36
        $region26: #{tpu_custom_call.1} parent=23 // pred_check_branch
          %146 = sbr.rel (%p144) target = $region28
        $region27: #{tpu_custom_call.1} parent=23 // pred_region
          %s147 = sand.u32 %s26, 1
          %s148 = scalar_lea.sflag [#allocation3], %s147
          %s149 = sand.u32 %s26, 1
          %s150 = smul.addr %s149, 8
          %s151 = scalar_lea.vmem [#allocation2], %s150
          %153 = vsyncadd %s148, 0
          %s154 = smul.addr %s16, 2
          %s155 = smul.addr %s154, 4
          %s156 = scalar_lea.hbm %s0, %s155
          %s158 = sshll.u32 %s156, 4
          %s159 = int_to_ptr.hbm [resolvable:$true] %s158
          %s160 = sshll.u32 %s151, 4
          %s161 = int_to_ptr.vmem [resolvable:$true] %s160
          %163 = dma.hbm_to_vmem [thread:$0]  %s159, 128, %s161, %s148
        $region28: #{tpu_custom_call.1} parent=23 // pred_fallthru
          _
      $region24: #{tpu_custom_call.1} parent=5 // pred_fallthru
        _
      %p164 = scmp.le.s32.totalorder 1, %s16
      %p165 = scmp.lt.s32.totalorder %s16, 3
      %p166 = pnand %p164, %p165
      %p167 = pneg %p166
      // Predicated region
      $region29: #{tpu_custom_call.1} parent=5 // pred_check
        _
      $region30: #{tpu_custom_call.1} parent=5 // pred_check_branch
        %169 = sbr.rel (%p166) target = $region32
      $region31: #{tpu_custom_call.1} parent=5 // pred_region
        %s170 = ssub.s32 %s16, 1
        %s171 = sand.u32 %s29, 1
        %s172 = scalar_lea.sflag [#allocation3], %s171
        %s173 = sand.u32 %s29, 1
        %s174 = smul.addr %s173, 8
        %s175 = scalar_lea.vmem [#allocation2], %s174
        // Predicated region
        $region33: #{tpu_custom_call.1} parent=31 // pred_check
          %p176 = pneg %p42
        $region34: #{tpu_custom_call.1} parent=31 // pred_check_branch
          %178 = sbr.rel (%p176) target = $region36
        $region35: #{tpu_custom_call.1} parent=31 // pred_region
          %180 = dma.done %s172, 128
        $region36: #{tpu_custom_call.1} parent=31 // pred_fallthru
          _
        // Predicated region
        $region37: #{tpu_custom_call.1} parent=31 // pred_check
          %p181 = pneg %p63
        $region38: #{tpu_custom_call.1} parent=31 // pred_check_branch
          %183 = sbr.rel (%p181) target = $region40
        $region39: #{tpu_custom_call.1} parent=31 // pred_region
          %185 = dma.done [#allocation6], 64
        $region40: #{tpu_custom_call.1} parent=31 // pred_fallthru
          _
        %s186 = sand.u32 %s29, 1
        %s187 = scalar_lea.sflag [#allocation3], %s186
        %s188 = sand.u32 %s29, 1
        %s189 = smul.addr %s188, 8
        %s190 = scalar_lea.vmem [#allocation2], %s189
        %p191 = pneg %p42
        %p192 = pneg %p39
        %p193 = pneg %p63
        %p194 = pneg %p60
        %p195 = pneg %p84
        %p196 = pneg %p81
        %p197 = pneg %p110
        %p198 = pneg %p107
        %s199 = sand.u32 %s97, 1
        %s200 = scalar_lea.sflag [#allocation4], %s199
        %s201 = sand.u32 %s97, 1
        %s202 = smul.addr %s201, 8
        %s203 = scalar_lea.vmem [#allocation7], %s202
        %v204 = vld [vmem:[%s175] sm:$0xff]
        %206 = vst [vmem:[#allocation1] ss:$2 sm:$0xff] %v204
        %v207 = vld.sshfl [vmem:[#allocation1] sm:$0xff pattern:$0x75316420]
        %v208 = vld.sshfl [vmem:[#allocation1 + $0x8] sm:$0xff pattern:$0x75316420]
        %vm211 = vcmask 1043456
        %v212 = vsel %vm211, %v207, 0.0
        %v213 = vsel %vm211, %v208, 0.0
        %v214 = vadd.f32 %v212, %v213
        %215 = vadd.xlane.f32.xlu0 %v214
        %v216 = vpop.xlane.xlu0 %215
        %v217 = vld [vmem:[#allocation5] sm:$0xf]
        %v218 = vld [vmem:[%s2] sm:$0x1]
        %v220 = vlaneseq
        %v221 = vand.u32 %v220, 127
        %v222 = vperm.slane %v216, %v221
        %vm223 = vcmask 31744
        %v224 = vsel %vm223, %v222, 0
        %v227 = vsel %vm211, %v217, 0
        %229 = vmatpush.msra.mxu0 0.0
        %230 = vmatpush.msra.mxu0 0.0
        %231 = vmatpush.msra.mxu0 0.0
        %232 = vmatpush.msra.mxu0 0.0
        %233 = vmatpush.msra.mxu0 0.0
        %234 = vmatpush.msra.mxu0 0.0
        %235 = vmatpush.msra.mxu0 0.0
        %236 = vmatpush.msra.mxu0 0.0
        %237 = vmatpush.msra.mxu0 0.0
        %238 = vmatpush.msra.mxu0 0.0
        %239 = vmatpush.msra.mxu0 0.0
        %240 = vmatpush.msra.mxu0 0.0
        %241 = vmatpush.msra.mxu0 0.0
        %242 = vmatpush.msra.mxu0 0.0
        %243 = vmatpush.msra.mxu0 0.0
        %244 = vmatpush.msra.mxu0 %v227
        %245 = vmatmul.f32.gmra.mxu0 %v224
        %v246 = vpop.f32.mrf.mxu0
        %v247 = vadd.f32 %v218, %v246
        %248 = vdwg.mxu0
        %v249 = vxor.u32 %v247, 2147483648
        %v250 = vmul.f32 %v249, 1.442695
        %v251 = vpow.pop %v250
        %v252 = vadd.f32 %v251, 1.0
        %v253 = vrcp.pop %v252
        %v254 = vmul.f32 %v252, %v253
        %v255 = vsub.f32 1.0, %v254
        %v256 = vmul.f32 %v253, %v255
        %v257 = vadd.f32 %v253, %v256
        %vm258 = vweird.f32 %v252
        %vm259 = vweird.f32 %v253
        %vm260 = vmor %vm258, %vm259
        %v261 = vsel %vm260, %v253, %v257
        %v262 = vand.u32 2147483647, %v252
        %vm263 = vcmp.eq.f32.partialorder %v262, 8.507059e+37
        %v264 = vand.u32 %v252, 2147483648
        %v265 = vor.u32 1.1754944e-38, %v264
        %v266 = vsel %vm263, %v265, %v261
        %v267 = vmul.f32 1.0, %v266
        %v268 = vperm.slane %v267, 0
        %v269 = vlaneseq
        %v270 = vshrl.u32 %v269, 7
        %272 = vset.pattern.permute.xlu0 %v270
        %273 = vperm.xlu0 %272, %v268
        %v274 = vpop.permute.xlu0 %273
        %v277 = vunpack.c.l.s4 839922192
        %v278 = vunpack.c.0.s8 %v277
        %v279 = vperm.slane %v274, %v278
        %v281 = vmul.f32 %v204, %v279
        %282 = vst [vmem:[%s203] sm:$0xff] %v281
        %s283 = sand.u32 %s97, 1
        %s284 = scalar_lea.sflag [#allocation4], %s283
        %s285 = sand.u32 %s97, 1
        %s286 = smul.addr %s285, 8
        %s287 = scalar_lea.vmem [#allocation7], %s286
        // Predicated region
        $region41: #{tpu_custom_call.1} parent=31 // pred_check
          %p288 = pneg %p107
        $region42: #{tpu_custom_call.1} parent=31 // pred_check_branch
          %290 = sbr.rel (%p288) target = $region44
        $region43: #{tpu_custom_call.1} parent=31 // pred_region
          %292 = vsyncadd %s284, 0
          %s293 = smul.addr %s21, 2
          %s294 = smul.addr %s293, 4
          %s295 = scalar_lea.hbm %s3, %s294
          %s297 = sshll.u32 %s287, 4
          %s298 = int_to_ptr.vmem [resolvable:$true] %s297
          %s299 = sshll.u32 %s295, 4
          %s300 = int_to_ptr.hbm [resolvable:$true] %s299
          %302 = dma.vmem_to_hbm [thread:$0]  %s298, 128, %s300, %s284
        $region44: #{tpu_custom_call.1} parent=31 // pred_fallthru
          _
      $region32: #{tpu_custom_call.1} parent=5 // pred_fallthru
        _
      %p303 = scmp.le.s32.totalorder 2, %s16
      // Predicated region
      $region45: #{tpu_custom_call.1} parent=5 // pred_check
        %p304 = pneg %p303
      $region46: #{tpu_custom_call.1} parent=5 // pred_check_branch
        %306 = sbr.rel (%p304) target = $region48
      $region47: #{tpu_custom_call.1} parent=5 // pred_region
        %s307 = ssub.s32 %s16, 2
        // Predicated region
        $region49: #{tpu_custom_call.1} parent=47 // pred_check
          %p308 = pneg %p113
        $region50: #{tpu_custom_call.1} parent=47 // pred_check_branch
          %310 = sbr.rel (%p308) target = $region52
        $region51: #{tpu_custom_call.1} parent=47 // pred_region
          %s311 = sand.u32 %s98, 1
          %s312 = scalar_lea.sflag [#allocation4], %s311
          %s313 = sand.u32 %s98, 1
          %s314 = smul.addr %s313, 8
          %s315 = scalar_lea.vmem [#allocation7], %s314
          %317 = dma.done %s312, 128
        $region52: #{tpu_custom_call.1} parent=47 // pred_fallthru
          _
      $region48: #{tpu_custom_call.1} parent=5 // pred_fallthru
        _
    $region6: #{tpu_custom_call.1} parent=1 // loop_footer
      %s20 = sadd.s32 1, %s16
    $region7: #{tpu_custom_call.1} parent=1 // loop_footer_branch
      %15 = sbr.rel target = $region3
    $region8: #{tpu_custom_call.1} parent=1 // loop_exit
      _
    %318 = vsyncpa [#allocation3], 1
    %s319 = scalar_lea.sflag [#allocation3], 1
    %320 = vsyncpa %s319, 1
    %321 = vsyncpa [#allocation6], 1
    %322 = vsyncpa [#allocation4], 1
    %s323 = scalar_lea.sflag [#allocation4], 1
    %324 = vsyncpa %s323, 1

</llo_original>
